<compile_context>
chip_gen: v6e
topology: v6e:2x2x1
jax: 0.10.0
libtpu: 0.0.40
codegen_flags: <defaults>
</compile_context>

<pallas_src>
import functools

import jax
import jax.numpy as jnp
from jax.experimental import pallas as pl
from jax.experimental.pallas import tpu as pltpu

_LANE = 128
_SUBLANE = 8


def _round_up(x, m):
    return ((x + m - 1) // m) * m


def _vmem_capacity_bytes():
    try:
        return int(pltpu.get_tpu_info().vmem_capacity_bytes)
    except Exception:
        return 64 * 1024 * 1024  # conservative default (v7x per-TensorCore VMEM)


@functools.lru_cache(maxsize=None)
def _single_buffered_weights_supported():
    """Probe whether pipeline_mode=pl.Buffered(1) (single-buffered resident blocks)
    is accepted by this JAX / Mosaic build.  Falls back to default double-buffering."""
    try:
        def _copy(x_ref, o_ref):
            o_ref[...] = x_ref[...]

        spec = pl.BlockSpec((_SUBLANE, _LANE), lambda i: (0, 0),
                            pipeline_mode=pl.Buffered(1))
        x = jnp.zeros((_SUBLANE, _LANE), jnp.float32)
        out = pl.pallas_call(
            _copy,
            out_shape=jax.ShapeDtypeStruct((_SUBLANE, _LANE), jnp.float32),
            grid_spec=pltpu.PrefetchScalarGridSpec(
                num_scalar_prefetch=0,
                grid=(1,),
                in_specs=[spec],
                out_specs=pl.BlockSpec((_SUBLANE, _LANE), lambda i: (0, 0)),
            ),
        )(x)
        jax.block_until_ready(out)
        return True
    except Exception:
        return False


# --------------------------------------------------------------------------- kernels
def _decoder_fused_kernel(z_ref, w1_ref, b1_ref, w2_ref, b2_ref, x_ref):
    # h = relu(z @ W1 + b1): MXU matmul with f32 accumulation, f32 bias/ReLU on the VPU.
    z = z_ref[...]
    w1 = w1_ref[...]
    h = jnp.dot(z.astype(w1.dtype), w1, preferred_element_type=jnp.float32)
    h = jnp.maximum(h + b1_ref[...], 0.0)
    # x = sigmoid(h @ W2 + b2): second MXU matmul, sigmoid on the EUP in f32.
    w2 = w2_ref[...]
    logits = jnp.dot(h.astype(w2.dtype), w2, preferred_element_type=jnp.float32)
    logits = logits + b2_ref[...]
    x_ref[...] = jax.nn.sigmoid(logits).astype(x_ref.dtype)


def _decoder_ntiled_kernel(z_ref, w1_ref, b1_ref, w2_ref, b2_ref, x_ref, h_ref):
    # Large-weight fallback: grid = (batch tiles, W2 column tiles).  h is computed once
    # per batch tile (j == 0) into a VMEM scratch and reused across the column tiles.
    @pl.when(pl.program_id(1) == 0)
    def _():
        z = z_ref[...]
        w1 = w1_ref[...]
        h = jnp.dot(z.astype(w1.dtype), w1, preferred_element_type=jnp.float32)
        h_ref[...] = jnp.maximum(h + b1_ref[...], 0.0)

    h = h_ref[...]
    w2 = w2_ref[...]
    logits = jnp.dot(h.astype(w2.dtype), w2, preferred_element_type=jnp.float32)
    logits = logits + b2_ref[...]
    x_ref[...] = jax.nn.sigmoid(logits).astype(x_ref.dtype)


# --------------------------------------------------------------------------- wrapper
def _pad2(a, shape, dtype):
    if a.shape == shape and a.dtype == jnp.dtype(dtype):
        return a
    out = jnp.zeros(shape, dtype)
    return out.at[: a.shape[0], : a.shape[1]].set(a.astype(dtype))


def pad_decoder_params(w1, b1, w2, b2, *, weight_dtype=jnp.bfloat16,
                       vmem_budget_bytes=None):
    """Pre-pad / pre-cast the decoder parameters ONCE (hoisted out of the per-call path).

    w1: (dim_z, dim_h); b1: (dim_h,); w2: (dim_h, dim_x); b2: (dim_x,) — i.e. the
    pre-transposed (in, out) form of nn.Linear's (out, in) weights.
    Returns (padded_arrays, meta) where meta holds the static tiling decisions.
    """
    dim_z, dim_h = w1.shape
    dim_h2, dim_x = w2.shape
    assert dim_h2 == dim_h, (w1.shape, w2.shape)

    dz_p = _round_up(dim_z, _SUBLANE)   # K of matmul-1: sublane-aligned W1 rows / z lanes
    dh_p = _round_up(dim_h, _LANE)      # lane-dense hidden dim
    dx_full = _round_up(dim_x, _LANE)   # lane-dense output dim (unmasked vst)

    capacity = _vmem_capacity_bytes()
    budget = vmem_budget_bytes if vmem_budget_bytes is not None else (capacity * 13) // 16

    wsize = jnp.dtype(weight_dtype).itemsize
    wbuf = 1 if _single_buffered_weights_supported() else 2   # resident-weight buffers
    slack = 1 << 20      # headroom for compiler-internal scratch
    ref_rows = 128       # want at least this many batch rows per tile in the fused path

    # Fused path feasibility: W1 + full W2 resident (+ biases) + tiles for ref_rows rows.
    fused_resident = wbuf * ((dz_p * dh_p + dh_p * dx_full) * wsize + (dh_p + dx_full) * 4)
    fused_per_row = (2 * dz_p * 4 + 2 * dx_full * 4
                     + (dh_p + dx_full) * 4 + (dz_p + dh_p) * wsize)
    if fused_resident + ref_rows * fused_per_row + slack <= budget:
        block_n = dx_full
    else:
        # Fallback: keep W1 resident, stream lane-dense column tiles of W2 (double-buffered
        # by the pipeline).  Solve for the largest 128-multiple tile width that still
        # leaves room for ~ref_rows batch rows (incl. the h scratch).
        a_const = wbuf * (dz_p * dh_p * wsize + dh_p * 4)
        c_const = 2 * dz_p * 4 + 2 * dh_p * 4 + (dz_p + dh_p) * 4 + (dz_p + dh_p) * wsize
        denom = 2 * dh_p * wsize + 8 + 12 * ref_rows
        tn_max = (budget - a_const - ref_rows * c_const - slack) // denom
        block_n = max((tn_max // _LANE) * _LANE, _LANE)
        block_n = min(block_n, dx_full)

    dx_p = _round_up(dim_x, block_n)
    n_blocks = dx_p // block_n

    # Zero padding is semantically inert: extra z columns hit zero W1 rows; extra W1
    # columns + zero b1 give relu(0)=0 hidden lanes; extra W2 rows are zero; extra W2
    # columns / b2 lanes produce sigmoid(0)=0.5 outputs that are sliced off.
    w1_p = _pad2(w1, (dz_p, dh_p), weight_dtype)
    b1_p = _pad2(b1.reshape(1, -1), (1, dh_p), jnp.float32)
    w2_p = _pad2(w2, (dh_p, dx_p), weight_dtype)
    b2_p = _pad2(b2.reshape(1, -1), (1, dx_p), jnp.float32)

    meta = dict(dim_z=dim_z, dim_x=dim_x, dz_p=dz_p, dh_p=dh_p, dx_p=dx_p,
                block_n=block_n, n_blocks=n_blocks, weight_itemsize=wsize,
                wbuf=wbuf, budget=budget, capacity=capacity)
    return (w1_p, b1_p, w2_p, b2_p), meta


def decoder_forward_padded(z, padded, meta, *, block_b=None):
    """Forward pass using pre-padded parameters from pad_decoder_params."""
    w1_p, b1_p, w2_p, b2_p = padded
    B, dim_z = z.shape
    assert dim_z == meta["dim_z"], (dim_z, meta["dim_z"])

    dz_p, dh_p, dx_p = meta["dz_p"], meta["dh_p"], meta["dx_p"]
    tn, nj = meta["block_n"], meta["n_blocks"]
    wsize, wbuf, budget = meta["weight_itemsize"], meta["wbuf"], meta["budget"]
    dim_x = meta["dim_x"]
    fused = (nj == 1)

    zsz = z.dtype.itemsize
    if fused:
        resident = wbuf * ((dz_p * dh_p + dh_p * dx_p) * wsize + (dh_p + dx_p) * 4)
        per_row = (2 * dz_p * zsz + 2 * dx_p * zsz
                   + (dh_p + dx_p) * 4 + (dz_p + dh_p) * wsize)
    else:
        resident = (wbuf * (dz_p * dh_p * wsize + dh_p * 4)
                    + 2 * (dh_p * tn * wsize + tn * 4))        # streamed W2/b2 tiles (x2)
        per_row = (2 * dz_p * zsz + 2 * tn * zsz + dh_p * 4     # h scratch
                   + (dh_p + tn) * 4 + (dz_p + dh_p) * wsize)

    slack = 1 << 20
    if block_b is None:
        avail = budget - resident - slack
        cap = avail // per_row if per_row > 0 else _SUBLANE
        cap = max((cap // _SUBLANE) * _SUBLANE, _SUBLANE)
        cap = min(cap, 2048)  # big tiles amortize the ~0.35us/step pipeline overhead
        # Waste-balancing near-divisor tile (multiple of 8) instead of always the cap.
        steps = -(-B // cap)
        tb = _round_up(-(-B // steps), _SUBLANE)
        if steps > 1 and steps % 2 == 1:
            # Prefer an even number of grid steps (balances v7x's two TensorCores under
            # "parallel" semantics) when it does not increase total padded rows.
            steps2 = steps + 1
            tb2 = _round_up(-(-B // steps2), _SUBLANE)
            if steps2 * tb2 <= steps * tb:
                steps, tb = steps2, tb2
        block_b = tb
    block_b = max(_round_up(block_b, _SUBLANE), _SUBLANE)

    B_p = _round_up(B, block_b)
    if (B_p, dz_p) != z.shape:
        z = jnp.zeros((B_p, dz_p), z.dtype).at[:B, :dim_z].set(z)

    need = resident + block_b * per_row + slack
    vmem_limit = int(max(32 << 20, min(need * 5 // 4 + (1 << 20), meta["capacity"])))

    cost = pl.CostEstimate(
        flops=2 * B_p * (dz_p * dh_p + dh_p * dx_p),
        transcendentals=2 * B_p * dx_p,  # sigmoid = exp + reciprocal per element
        bytes_accessed=(B_p * dz_p * zsz
                        + (dz_p * dh_p + dh_p * dx_p) * wsize
                        + (dh_p + dx_p) * 4
                        + B_p * dx_p * zsz),
    )

    # Constant-index weight/bias blocks: single-buffer when supported.
    wspec_kwargs = dict(pipeline_mode=pl.Buffered(1)) if wbuf == 1 else {}
    grid_b = B_p // block_b

    if fused:
        grid = (grid_b,)
        in_specs = [
            pl.BlockSpec((block_b, dz_p), lambda i: (i, 0)),                  # z tiles
            pl.BlockSpec((dz_p, dh_p), lambda i: (0, 0), **wspec_kwargs),     # W1 resident
            pl.BlockSpec((1, dh_p), lambda i: (0, 0), **wspec_kwargs),        # b1 resident
            pl.BlockSpec((dh_p, dx_p), lambda i: (0, 0), **wspec_kwargs),     # W2 resident
            pl.BlockSpec((1, dx_p), lambda i: (0, 0), **wspec_kwargs),        # b2 resident
        ]
        out_spec = pl.BlockSpec((block_b, dx_p), lambda i: (i, 0))
        kernel = _decoder_fused_kernel
        scratch = []
        dims = ("parallel",)
    else:
        grid = (grid_b, nj)
        in_specs = [
            pl.BlockSpec((block_b, dz_p), lambda i, j: (i, 0)),
            pl.BlockSpec((dz_p, dh_p), lambda i, j: (0, 0), **wspec_kwargs),
            pl.BlockSpec((1, dh_p), lambda i, j: (0, 0), **wspec_kwargs),
            pl.BlockSpec((dh_p, tn), lambda i, j: (0, j)),   # W2 column tiles, streamed
            pl.BlockSpec((1, tn), lambda i, j: (0, j)),
        ]
        out_spec = pl.BlockSpec((block_b, tn), lambda i, j: (i, j))
        kernel = _decoder_ntiled_kernel
        scratch = [pltpu.VMEM((block_b, dh_p), jnp.float32)]   # h, reused across j
        dims = ("parallel", "arbitrary")

    out_padded = pl.pallas_call(
        kernel,
        out_shape=jax.ShapeDtypeStruct((B_p, dx_p), z.dtype),
        grid_spec=pltpu.PrefetchScalarGridSpec(
            num_scalar_prefetch=0,
            grid=grid,
            in_specs=in_specs,
            out_specs=out_spec,
            scratch_shapes=scratch,
        ),
        compiler_params=pltpu.CompilerParams(
            dimension_semantics=dims,
            vmem_limit_bytes=vmem_limit,
        ),
        cost_estimate=cost,
    )(z, w1_p, b1_p, w2_p, b2_p)

    # Strip batch / lane padding (padded lanes hold sigmoid(0)=0.5 -> must be sliced).
    return out_padded[:B, :dim_x]


def decoder_forward(z, w1, b1, w2, b2, *, weight_dtype=jnp.bfloat16,
                    block_b=None, vmem_budget_bytes=None):
    """Convenience wrapper: pads the parameters and runs the forward pass."""
    padded, meta = pad_decoder_params(w1, b1, w2, b2, weight_dtype=weight_dtype,
                                      vmem_budget_bytes=vmem_budget_bytes)
    return decoder_forward_padded(z, padded, meta, block_b=block_b)


def reference_forward(z, w1, b1, w2, b2):
    h = jnp.maximum(z @ w1 + b1, 0.0)
    return jax.nn.sigmoid(h @ w2 + b2)


if __name__ == "__main__":
    # Small shapes consistent with Decoder(dim_z, dim_h, dim_x).
    B, dim_z, dim_h, dim_x = 8, 8, 32, 64

    key = jax.random.PRNGKey(0)
    kz, k1, kb1, k2, kb2, k3 = jax.random.split(key, 6)

    # nn.Linear weights are (out, in); we store the already-transposed (in, out) form.
    z = jax.random.normal(kz, (B, dim_z), dtype=jnp.float32)
    w1 = jax.random.normal(k1, (dim_z, dim_h), dtype=jnp.float32) * 0.1
    b1 = jax.random.normal(kb1, (dim_h,), dtype=jnp.float32) * 0.1
    w2 = jax.random.normal(k2, (dim_h, dim_x), dtype=jnp.float32) * 0.1
    b2 = jax.random.normal(kb2, (dim_x,), dtype=jnp.float32) * 0.1

    ref = reference_forward(z, w1, b1, w2, b2)

    # 1) f32 weights, parameters padded ONCE (hoisted out of the per-call path), jitted.
    padded_f32, meta_f32 = pad_decoder_params(w1, b1, w2, b2, weight_dtype=jnp.float32)
    fwd = jax.jit(functools.partial(decoder_forward_padded, meta=meta_f32))
    out = jax.block_until_ready(fwd(z, padded_f32))
    assert out.shape == (B, dim_x), out.shape
    assert jnp.allclose(out, ref, atol=1e-5, rtol=1e-5), float(jnp.max(jnp.abs(out - ref)))

    # 2) default bf16-weight path (f32 accumulation) — looser tolerance.
    out_bf16 = jax.block_until_ready(decoder_forward(z, w1, b1, w2, b2))
    assert out_bf16.shape == (B, dim_x)
    assert jnp.allclose(out_bf16, ref, atol=2e-2, rtol=2e-2)

    # 3) batch that is not a multiple of the tile (exercises batch padding logic).
    B2 = 13
    z2 = jax.random.normal(jax.random.PRNGKey(1), (B2, dim_z), dtype=jnp.float32)
    out2 = jax.block_until_ready(decoder_forward_padded(z2, padded_f32, meta_f32))
    ref2 = reference_forward(z2, w1, b1, w2, b2)
    assert out2.shape == (B2, dim_x), out2.shape
    assert jnp.allclose(out2, ref2, atol=1e-5, rtol=1e-5), float(jnp.max(jnp.abs(out2 - ref2)))

    # 4) forced large-weight fallback (column-tiled W2 + h scratch reuse) via a tiny
    #    artificial VMEM budget; also exercises dim_z padding (20 -> 24).
    B3, dz3, dh3, dx3 = 24, 20, 32, 512
    kk = jax.random.split(k3, 5)
    z3 = jax.random.normal(kk[0], (B3, dz3), dtype=jnp.float32)
    w1c = jax.random.normal(kk[1], (dz3, dh3), dtype=jnp.float32) * 0.1
    b1c = jax.random.normal(kk[2], (dh3,), dtype=jnp.float32) * 0.1
    w2c = jax.random.normal(kk[3], (dh3, dx3), dtype=jnp.float32) * 0.1
    b2c = jax.random.normal(kk[4], (dx3,), dtype=jnp.float32) * 0.1
    padded_c, meta_c = pad_decoder_params(w1c, b1c, w2c, b2c, weight_dtype=jnp.float32,
                                          vmem_budget_bytes=512 * 1024)
    assert meta_c["n_blocks"] > 1, meta_c  # make sure the fallback path is exercised
    out3 = jax.block_until_ready(decoder_forward_padded(z3, padded_c, meta_c))
    ref3 = reference_forward(z3, w1c, b1c, w2c, b2c)
    assert out3.shape == (B3, dx3), out3.shape
    assert jnp.allclose(out3, ref3, atol=1e-5, rtol=1e-5), float(jnp.max(jnp.abs(out3 - ref3)))

    print("KERNEL_OK")
</pallas_src>

<mosaic_0001>
module attributes {stable_mosaic.version = 11 : i64} {
  func.func @_copy(%arg0: i32, %arg1: memref<8x128xf32, #tpu.memory_space<vmem>>, %arg2: memref<8x128xf32, #tpu.memory_space<vmem>>) attributes {dimension_semantics = [#tpu.dimension_semantics<arbitrary>], iteration_bounds = array<i64: 1>, scalar_prefetch = 0 : i64, scratch_operands = 0 : i64, tpu.core_type = #tpu.core_type<tc>, window_params = [{pipeline_mode = #tpu.pipeline_mode<synchronous>, transform_indices = @transform_0, window_bounds = array<i64: 8, 128>}, {pipeline_mode = #tpu.pipeline_mode<synchronous>, transform_indices = @transform_1, window_bounds = array<i64: 8, 128>}]} {
    %c0 = arith.constant 0 : index
    %c0_0 = arith.constant 0 : index
    %0 = vector.load %arg1[%c0, %c0_0] : memref<8x128xf32, #tpu.memory_space<vmem>>, vector<8x128xf32>
    %c0_1 = arith.constant 0 : index
    %c0_2 = arith.constant 0 : index
    %1 = vector.load %arg2[%c0_1, %c0_2] : memref<8x128xf32, #tpu.memory_space<vmem>>, vector<8x128xf32>
    tpu.vector_store %arg2[%c0_1, %c0_2], %0 {strides = array<i32>} : memref<8x128xf32, #tpu.memory_space<vmem>>, vector<8x128xf32>,
    return
  }
  func.func @transform_0(%arg0: i32) -> (i32, i32) {
    %c0_i32 = arith.constant 0 : i32
    %c0_i32_0 = arith.constant 0 : i32
    %c0_i32_1 = arith.constant 0 : i32
    return %c0_i32, %c0_i32_0 : i32, i32
  }
  func.func @transform_1(%arg0: i32) -> (i32, i32) {
    %c0_i32 = arith.constant 0 : i32
    %c0_i32_0 = arith.constant 0 : i32
    %c0_i32_1 = arith.constant 0 : i32
    return %c0_i32, %c0_i32_0 : i32, i32
  }
}

module attributes {stable_mosaic.version = 11 : i64} {
  func.func @_decoder_fused_kernel(%arg0: i32, %arg1: memref<8x8xf32, #tpu.memory_space<vmem>>, %arg2: memref<8x128xf32, #tpu.memory_space<vmem>>, %arg3: memref<1x128xf32, #tpu.memory_space<vmem>>, %arg4: memref<128x128xf32, #tpu.memory_space<vmem>>, %arg5: memref<1x128xf32, #tpu.memory_space<vmem>>, %arg6: memref<8x128xf32, #tpu.memory_space<vmem>>) attributes {dimension_semantics = [#tpu.dimension_semantics<parallel>], iteration_bounds = array<i64: 1>, scalar_prefetch = 0 : i64, scratch_operands = 0 : i64, tpu.core_type = #tpu.core_type<tc>, window_params = [{transform_indices = @transform_0, window_bounds = array<i64: 8, 8>}, {pipeline_mode = #tpu.pipeline_mode<synchronous>, transform_indices = @transform_1, window_bounds = array<i64: 8, 128>}, {pipeline_mode = #tpu.pipeline_mode<synchronous>, transform_indices = @transform_2, window_bounds = array<i64: 1, 128>}, {pipeline_mode = #tpu.pipeline_mode<synchronous>, transform_indices = @transform_3, window_bounds = array<i64: 128, 128>}, {pipeline_mode = #tpu.pipeline_mode<synchronous>, transform_indices = @transform_4, window_bounds = array<i64: 1, 128>}, {transform_indices = @transform_5, window_bounds = array<i64: 8, 128>}]} {
    %c0 = arith.constant 0 : index
    %c0_0 = arith.constant 0 : index
    %0 = vector.load %arg1[%c0, %c0_0] : memref<8x8xf32, #tpu.memory_space<vmem>>, vector<8x8xf32>
    %c0_1 = arith.constant 0 : index
    %c0_2 = arith.constant 0 : index
    %1 = vector.load %arg2[%c0_1, %c0_2] : memref<8x128xf32, #tpu.memory_space<vmem>>, vector<8x128xf32>
    %cst = arith.constant dense<0.000000e+00> : vector<8x128xf32>
    %2 = tpu.matmul %0, %1, %cst {dimension_numbers = #tpu.dot_dimension_numbers<[1], [0], [0], [1], [0, 0, 1, 1], [], []>} : vector<8x8xf32>, vector<8x128xf32>, vector<8x128xf32> -> vector<8x128xf32>
    %c0_3 = arith.constant 0 : index
    %c0_4 = arith.constant 0 : index
    %3 = vector.load %arg3[%c0_3, %c0_4] : memref<1x128xf32, #tpu.memory_space<vmem>>, vector<1x128xf32>
    %4 = vector.broadcast %3 : vector<1x128xf32> to vector<8x128xf32>
    %5 = arith.addf %2, %4 : vector<8x128xf32>
    %cst_5 = arith.constant 0.000000e+00 : f32
    %6 = vector.broadcast %cst_5 : f32 to vector<8x128xf32>
    %7 = arith.maximumf %5, %6 : vector<8x128xf32>
    %c0_6 = arith.constant 0 : index
    %c0_7 = arith.constant 0 : index
    %8 = vector.load %arg4[%c0_6, %c0_7] : memref<128x128xf32, #tpu.memory_space<vmem>>, vector<128x128xf32>
    %cst_8 = arith.constant dense<0.000000e+00> : vector<8x128xf32>
    %9 = tpu.matmul %7, %8, %cst_8 {dimension_numbers = #tpu.dot_dimension_numbers<[1], [0], [0], [1], [0, 0, 1, 1], [], []>} : vector<8x128xf32>, vector<128x128xf32>, vector<8x128xf32> -> vector<8x128xf32>
    %c0_9 = arith.constant 0 : index
    %c0_10 = arith.constant 0 : index
    %10 = vector.load %arg5[%c0_9, %c0_10] : memref<1x128xf32, #tpu.memory_space<vmem>>, vector<1x128xf32>
    %11 = vector.broadcast %10 : vector<1x128xf32> to vector<8x128xf32>
    %12 = arith.addf %9, %11 : vector<8x128xf32>
    %13 = arith.negf %12 : vector<8x128xf32>
    %14 = math.exp %13 : vector<8x128xf32>
    %cst_11 = arith.constant 1.000000e+00 : f32
    %15 = vector.broadcast %cst_11 : f32 to vector<8x128xf32>
    %16 = arith.addf %15, %14 : vector<8x128xf32>
    %17 = arith.divf %15, %16 : vector<8x128xf32>
    %c0_12 = arith.constant 0 : index
    %c0_13 = arith.constant 0 : index
    %18 = vector.load %arg6[%c0_12, %c0_13] : memref<8x128xf32, #tpu.memory_space<vmem>>, vector<8x128xf32>
    tpu.vector_store %arg6[%c0_12, %c0_13], %17 {strides = array<i32>} : memref<8x128xf32, #tpu.memory_space<vmem>>, vector<8x128xf32>,
    return
  }
  func.func @transform_0(%arg0: i32) -> (i32, i32) {
    %c0_i32 = arith.constant 0 : i32
    %c0_i32_0 = arith.constant 0 : i32
    return %arg0, %c0_i32 : i32, i32
  }
  func.func @transform_1(%arg0: i32) -> (i32, i32) {
    %c0_i32 = arith.constant 0 : i32
    %c0_i32_0 = arith.constant 0 : i32
    %c0_i32_1 = arith.constant 0 : i32
    return %c0_i32, %c0_i32_0 : i32, i32
  }
  func.func @transform_2(%arg0: i32) -> (i32, i32) {
    %c0_i32 = arith.constant 0 : i32
    %c0_i32_0 = arith.constant 0 : i32
    %c0_i32_1 = arith.constant 0 : i32
    return %c0_i32, %c0_i32_0 : i32, i32
  }
  func.func @transform_3(%arg0: i32) -> (i32, i32) {
    %c0_i32 = arith.constant 0 : i32
    %c0_i32_0 = arith.constant 0 : i32
    %c0_i32_1 = arith.constant 0 : i32
    return %c0_i32, %c0_i32_0 : i32, i32
  }
  func.func @transform_4(%arg0: i32) -> (i32, i32) {
    %c0_i32 = arith.constant 0 : i32
    %c0_i32_0 = arith.constant 0 : i32
    %c0_i32_1 = arith.constant 0 : i32
    return %c0_i32, %c0_i32_0 : i32, i32
  }
  func.func @transform_5(%arg0: i32) -> (i32, i32) {
    %c0_i32 = arith.constant 0 : i32
    %c0_i32_0 = arith.constant 0 : i32
    return %arg0, %c0_i32 : i32, i32
  }
}

</mosaic_0001>

<llo_original>
// kernel: tpu_custom_call.1
$region0: #{tpu_custom_call.1}
  #allocation0 [shape = 'u32[]', space=smem, size = 0x4, offset = 0x4, fixed_abs, tag = 'smem constant byte address 0x4 - core index']
  #allocation1 [shape = 'u32[144,128]{1,0:T(1,128)}', space=vmem, size = 0x12000, scoped, tag = 'internal scratch']
  %s0 = inlined_call_operand.hbm [shape: f32[8,128], index: 0, kind: input, shape index: {}]
  %s1 = inlined_call_operand.hbm [shape: f32[8,128], index: 1, kind: output, shape index: {}]
  %s2 = sld [smem:[#allocation0]]
  $region18: #{tpu_custom_call.1} parent=0
    _
  %s4 = ssub.s32 1, %s2
  %s5 = scalar_select 0, %s4, %s2
  $region1: #{tpu_custom_call.1} parent=0
    #allocation2 [shape = 'u8[4096]{0}', space=vmem, size = 0x1000, scoped, tag = 'input window, operand 0, single buffered']
    #allocation3 [shape = 's32[1]{0}', space=sflag, size = 0x4, scoped, tag = 'scoped memory for tpu_custom_call.1']
    #allocation4 [shape = 's32[1]{0}', space=sflag, size = 0x4, scoped, tag = 'scoped memory for tpu_custom_call.1']
    #allocation5 [shape = 'u8[4096]{0}', space=vmem, size = 0x1000, scoped, tag = 'output window, operand 0, single buffered']
    %6 = vsyncpa [#allocation3], 0
    %7 = vsyncpa [#allocation4], 0
    // Predicated region
    $region2: #{tpu_custom_call.1} parent=1 // pred_check
      _
    $region3: #{tpu_custom_call.1} parent=1 // pred_check_branch
      %9 = sbr.rel (0) target = $region5
    $region4: #{tpu_custom_call.1} parent=1 // pred_region
      %s11 = ssub.s32 128, 128
      %12 = vsyncadd [#allocation3], %s11
      %s14 = sshll.u32 [#allocation2], 4
      %s15 = int_to_ptr.vmem [resolvable:$true] %s14
      %17 = dma.hbm_to_vmem [thread:$0]  %s0, 128, %s15, [#allocation3]
    $region5: #{tpu_custom_call.1} parent=1 // pred_fallthru
      _
    // Predicated region
    $region6: #{tpu_custom_call.1} parent=1 // pred_check
      _
    $region7: #{tpu_custom_call.1} parent=1 // pred_check_branch
      %19 = sbr.rel (0) target = $region9
    $region8: #{tpu_custom_call.1} parent=1 // pred_region
      %20 = dma.done [#allocation3], 128
    $region9: #{tpu_custom_call.1} parent=1 // pred_fallthru
      _
    %v21 = vld [vmem:[#allocation2] sm:$0xff]
    %22 = vst [vmem:[#allocation5] sm:$0xff] %v21
    // Predicated region
    $region10: #{tpu_custom_call.1} parent=1 // pred_check
      _
    $region11: #{tpu_custom_call.1} parent=1 // pred_check_branch
      %24 = sbr.rel (0) target = $region13
    $region12: #{tpu_custom_call.1} parent=1 // pred_region
      %s26 = ssub.s32 128, 128
      %27 = vsyncadd [#allocation4], %s26
      %s29 = sshll.u32 [#allocation5], 4
      %s30 = int_to_ptr.vmem [resolvable:$true] %s29
      %32 = dma.vmem_to_hbm [thread:$0]  %s30, 128, %s1, [#allocation4]
    $region13: #{tpu_custom_call.1} parent=1 // pred_fallthru
      _
    // Predicated region
    $region14: #{tpu_custom_call.1} parent=1 // pred_check
      _
    $region15: #{tpu_custom_call.1} parent=1 // pred_check_branch
      %34 = sbr.rel (0) target = $region17
    $region16: #{tpu_custom_call.1} parent=1 // pred_region
      %35 = dma.done [#allocation4], 128
    $region17: #{tpu_custom_call.1} parent=1 // pred_fallthru
      _
    %36 = vsyncpa [#allocation3], 1
    %37 = vsyncpa [#allocation4], 1

// kernel: decoder_forward_padded.1
$region0: #{decoder_forward_padded.1}
  #allocation0 [shape = 'u32[]', space=smem, size = 0x4, offset = 0x4, fixed_abs, tag = 'smem constant byte address 0x4 - core index']
  #allocation1 [shape = 'u32[144,128]{1,0:T(1,128)}', space=vmem, size = 0x12000, scoped, tag = 'internal scratch']
  %s0 = inlined_call_operand.hbm [shape: f32[8,8], index: 0, kind: input, shape index: {}]
  %s1 = inlined_call_operand.hbm [shape: f32[8,128], index: 1, kind: input, shape index: {}]
  %s2 = inlined_call_operand.vmem [shape: f32[1,128], index: 2, kind: input, shape index: {}]
  %s3 = inlined_call_operand.hbm [shape: f32[128,128], index: 3, kind: input, shape index: {}]
  %s4 = inlined_call_operand.vmem [shape: f32[1,128], index: 4, kind: input, shape index: {}]
  %s5 = inlined_call_operand.hbm [shape: f32[8,128], index: 5, kind: output, shape index: {}]
  %s6 = sld [smem:[#allocation0]]
  $region42: #{decoder_forward_padded.1} parent=0
    _
  %s8 = ssub.s32 1, %s6
  %s9 = scalar_select 0, %s8, %s6
  $region1: #{decoder_forward_padded.1} parent=0
    #allocation2 [shape = 'u8[4096]{0}', space=vmem, size = 0x1000, scoped, tag = 'input window, operand 0, single buffered']
    #allocation3 [shape = 's32[1]{0}', space=sflag, size = 0x4, scoped, tag = 'scoped memory for decoder_forward_padded.1']
    #allocation4 [shape = 's32[1]{0}', space=sflag, size = 0x4, scoped, tag = 'scoped memory for decoder_forward_padded.1']
    #allocation5 [shape = 'u8[4096]{0}', space=vmem, size = 0x1000, scoped, tag = 'input window, operand 1, single buffered']
    #allocation6 [shape = 's32[1]{0}', space=sflag, size = 0x4, scoped, tag = 'scoped memory for decoder_forward_padded.1']
    #allocation7 [shape = 'u8[65536]{0}', space=vmem, size = 0x10000, scoped, tag = 'input window, operand 3, single buffered']
    #allocation8 [shape = 'u8[4096]{0}', space=vmem, size = 0x1000, scoped, tag = 'output window, operand 0, single buffered']
    %10 = vsyncpa [#allocation3], 0
    %11 = vsyncpa [#allocation6], 0
    %12 = vsyncpa [#allocation4], 0
    // Predicated region
    $region2: #{decoder_forward_padded.1} parent=1 // pred_check
      _
    $region3: #{decoder_forward_padded.1} parent=1 // pred_check_branch
      %14 = sbr.rel (0) target = $region5
    $region4: #{decoder_forward_padded.1} parent=1 // pred_region
      %s16 = ssub.s32 128, 128
      %17 = vsyncadd [#allocation3], %s16
      %s19 = sshll.u32 [#allocation2], 4
      %s20 = int_to_ptr.vmem [resolvable:$true] %s19
      %22 = dma.hbm_to_vmem [thread:$0]  %s0, 128, %s20, [#allocation3]
    $region5: #{decoder_forward_padded.1} parent=1 // pred_fallthru
      _
    // Predicated region
    $region6: #{decoder_forward_padded.1} parent=1 // pred_check
      _
    $region7: #{decoder_forward_padded.1} parent=1 // pred_check_branch
      %24 = sbr.rel (0) target = $region9
    $region8: #{decoder_forward_padded.1} parent=1 // pred_region
      %s26 = ssub.s32 128, 128
      %27 = vsyncadd [#allocation6], %s26
      %s29 = sshll.u32 [#allocation5], 4
      %s30 = int_to_ptr.vmem [resolvable:$true] %s29
      %32 = dma.hbm_to_vmem [thread:$0]  %s1, 128, %s30, [#allocation6]
    $region9: #{decoder_forward_padded.1} parent=1 // pred_fallthru
      _
    // Predicated region
    $region10: #{decoder_forward_padded.1} parent=1 // pred_check
      _
    $region11: #{decoder_forward_padded.1} parent=1 // pred_check_branch
      %34 = sbr.rel (0) target = $region13
    $region12: #{decoder_forward_padded.1} parent=1 // pred_region
      _
    $region13: #{decoder_forward_padded.1} parent=1 // pred_fallthru
      _
    // Predicated region
    $region14: #{decoder_forward_padded.1} parent=1 // pred_check
      _
    $region15: #{decoder_forward_padded.1} parent=1 // pred_check_branch
      %36 = sbr.rel (0) target = $region17
    $region16: #{decoder_forward_padded.1} parent=1 // pred_region
      %s38 = ssub.s32 2048, 2048
      %39 = vsyncadd [#allocation6], %s38
      %s40 = sshll.u32 [#allocation7], 4
      %s41 = int_to_ptr.vmem [resolvable:$true] %s40
      %46 = dma.hbm_to_vmem [thread:$0]  %s3, 2048, %s41, [#allocation6], 128, 128, 8
    $region17: #{decoder_forward_padded.1} parent=1 // pred_fallthru
      _
    // Predicated region
    $region18: #{decoder_forward_padded.1} parent=1 // pred_check
      _
    $region19: #{decoder_forward_padded.1} parent=1 // pred_check_branch
      %48 = sbr.rel (0) target = $region21
    $region20: #{decoder_forward_padded.1} parent=1 // pred_region
      _
    $region21: #{decoder_forward_padded.1} parent=1 // pred_fallthru
      _
    // Predicated region
    $region22: #{decoder_forward_padded.1} parent=1 // pred_check
      _
    $region23: #{decoder_forward_padded.1} parent=1 // pred_check_branch
      %50 = sbr.rel (0) target = $region25
    $region24: #{decoder_forward_padded.1} parent=1 // pred_region
      %51 = dma.done [#allocation3], 128
    $region25: #{decoder_forward_padded.1} parent=1 // pred_fallthru
      _
    // Predicated region
    $region26: #{decoder_forward_padded.1} parent=1 // pred_check
      _
    $region27: #{decoder_forward_padded.1} parent=1 // pred_check_branch
      %53 = sbr.rel (0) target = $region29
    $region28: #{decoder_forward_padded.1} parent=1 // pred_region
      %54 = dma.done [#allocation6], 128
    $region29: #{decoder_forward_padded.1} parent=1 // pred_fallthru
      _
    // Predicated region
    $region30: #{decoder_forward_padded.1} parent=1 // pred_check
      _
    $region31: #{decoder_forward_padded.1} parent=1 // pred_check_branch
      %56 = sbr.rel (0) target = $region33
    $region32: #{decoder_forward_padded.1} parent=1 // pred_region
      %57 = dma.done [#allocation6], 2048
    $region33: #{decoder_forward_padded.1} parent=1 // pred_fallthru
      _
    %v58 = vld [vmem:[#allocation2] sm:$0xff]
    %v59 = vld [vmem:[#allocation5] sm:$0xff]
    %v60 = vld [vmem:[%s2] sm:$0x1]
    %v62 = vlaneseq
    %v63 = vshrl.u32 %v62, 7
    %v64 = vsub.s32 0, %v63
    %v65 = vrot.slane %v60, %v64
    %vm67 = vcmask 64512
    %v69 = vsel %vm67, %v58, 0
    %71 = vmatprep.subr.mxu0 0.0
    %72 = vmatpush1.msra.mxu0 0.0
    %73 = vmatprep.subr.mxu0 0.0
    %74 = vmatpush1.msra.mxu0 0.0
    %75 = vmatprep.subr.mxu0 0.0
    %76 = vmatpush1.msra.mxu0 0.0
    %77 = vmatprep.subr.mxu0 0.0
    %78 = vmatpush1.msra.mxu0 0.0
    %79 = vmatprep.subr.mxu0 0.0
    %80 = vmatpush1.msra.mxu0 0.0
    %81 = vmatprep.subr.mxu0 0.0
    %82 = vmatpush1.msra.mxu0 0.0
    %83 = vmatprep.subr.mxu0 0.0
    %84 = vmatpush1.msra.mxu0 0.0
    %85 = vmatprep.subr.mxu0 0.0
    %86 = vmatpush1.msra.mxu0 0.0
    %87 = vmatprep.subr.mxu0 0.0
    %88 = vmatpush1.msra.mxu0 0.0
    %89 = vmatprep.subr.mxu0 0.0
    %90 = vmatpush1.msra.mxu0 0.0
    %91 = vmatprep.subr.mxu0 0.0
    %92 = vmatpush1.msra.mxu0 0.0
    %93 = vmatprep.subr.mxu0 0.0
    %94 = vmatpush1.msra.mxu0 0.0
    %95 = vmatprep.subr.mxu0 0.0
    %96 = vmatpush1.msra.mxu0 0.0
    %97 = vmatprep.subr.mxu0 0.0
    %98 = vmatpush1.msra.mxu0 0.0
    %99 = vmatprep.subr.mxu0 0.0
    %100 = vmatpush1.msra.mxu0 0.0
    %101 = vmatprep.subr.mxu0 0.0
    %102 = vmatpush1.msra.mxu0 %v59
    %103 = vmatprep.subr.mxu0 0.0
    %104 = vmatpush2.msra.mxu0 0.0
    %105 = vmatprep.subr.mxu0 0.0
    %106 = vmatpush2.msra.mxu0 0.0
    %107 = vmatprep.subr.mxu0 0.0
    %108 = vmatpush2.msra.mxu0 0.0
    %109 = vmatprep.subr.mxu0 0.0
    %110 = vmatpush2.msra.mxu0 0.0
    %111 = vmatprep.subr.mxu0 0.0
    %112 = vmatpush2.msra.mxu0 0.0
    %113 = vmatprep.subr.mxu0 0.0
    %114 = vmatpush2.msra.mxu0 0.0
    %115 = vmatprep.subr.mxu0 0.0
    %116 = vmatpush2.msra.mxu0 0.0
    %117 = vmatprep.subr.mxu0 0.0
    %118 = vmatpush2.msra.mxu0 0.0
    %119 = vmatprep.subr.mxu0 0.0
    %120 = vmatpush2.msra.mxu0 0.0
    %121 = vmatprep.subr.mxu0 0.0
    %122 = vmatpush2.msra.mxu0 0.0
    %123 = vmatprep.subr.mxu0 0.0
    %124 = vmatpush2.msra.mxu0 0.0
    %125 = vmatprep.subr.mxu0 0.0
    %126 = vmatpush2.msra.mxu0 0.0
    %127 = vmatprep.subr.mxu0 0.0
    %128 = vmatpush2.msra.mxu0 0.0
    %129 = vmatprep.subr.mxu0 0.0
    %130 = vmatpush2.msra.mxu0 0.0
    %131 = vmatprep.subr.mxu0 0.0
    %132 = vmatpush2.msra.mxu0 0.0
    %133 = vmatprep.subr.mxu0 0.0
    %134 = vmatpush2.msra.mxu0 0.0
    %135 = vmatprep.mubr.f32.mxu0 0.0
    %136 = vmatmul.mubr.f32.gmra.mxu0 %v69
    %v137 = vpop.f32.mrf.mxu0
    %v138 = vadd.f32 %v65, %v137
    %v139 = vpop.f32.mrf.mxu0
    %140 = vdwg.mxu0
    %v141 = vmax.f32 %v138, 0.0
    %v142 = vld [vmem:[#allocation7] sm:$0xff]
    %v143 = vld [vmem:[#allocation7 + $0x8] sm:$0xff]
    %v144 = vld [vmem:[#allocation7 + $0x10] sm:$0xff]
    %v145 = vld [vmem:[#allocation7 + $0x18] sm:$0xff]
    %v146 = vld [vmem:[#allocation7 + $0x20] sm:$0xff]
    %v147 = vld [vmem:[#allocation7 + $0x28] sm:$0xff]
    %v148 = vld [vmem:[#allocation7 + $0x30] sm:$0xff]
    %v149 = vld [vmem:[#allocation7 + $0x38] sm:$0xff]
    %v150 = vld [vmem:[#allocation7 + $0x40] sm:$0xff]
    %v151 = vld [vmem:[#allocation7 + $0x48] sm:$0xff]
    %v152 = vld [vmem:[#allocation7 + $0x50] sm:$0xff]
    %v153 = vld [vmem:[#allocation7 + $0x58] sm:$0xff]
    %v154 = vld [vmem:[#allocation7 + $0x60] sm:$0xff]
    %v155 = vld [vmem:[#allocation7 + $0x68] sm:$0xff]
    %v156 = vld [vmem:[#allocation7 + $0x70] sm:$0xff]
    %v157 = vld [vmem:[#allocation7 + $0x78] sm:$0xff]
    %v158 = vld [vmem:[%s4] sm:$0x1]
    %v160 = vlaneseq
    %v161 = vshrl.u32 %v160, 7
    %v162 = vsub.s32 0, %v161
    %v163 = vrot.slane %v158, %v162
    %165 = vmatprep.subr.mxu0 0.0
    %166 = vmatpush1.msra.mxu0 %v157
    %167 = vmatprep.subr.mxu0 0.0
    %168 = vmatpush1.msra.mxu0 %v156
    %169 = vmatprep.subr.mxu0 0.0
    %170 = vmatpush1.msra.mxu0 %v155
    %171 = vmatprep.subr.mxu0 0.0
    %172 = vmatpush1.msra.mxu0 %v154
    %173 = vmatprep.subr.mxu0 0.0
    %174 = vmatpush1.msra.mxu0 %v153
    %175 = vmatprep.subr.mxu0 0.0
    %176 = vmatpush1.msra.mxu0 %v152
    %177 = vmatprep.subr.mxu0 0.0
    %178 = vmatpush1.msra.mxu0 %v151
    %179 = vmatprep.subr.mxu0 0.0
    %180 = vmatpush1.msra.mxu0 %v150
    %181 = vmatprep.subr.mxu0 0.0
    %182 = vmatpush1.msra.mxu0 %v149
    %183 = vmatprep.subr.mxu0 0.0
    %184 = vmatpush1.msra.mxu0 %v148
    %185 = vmatprep.subr.mxu0 0.0
    %186 = vmatpush1.msra.mxu0 %v147
    %187 = vmatprep.subr.mxu0 0.0
    %188 = vmatpush1.msra.mxu0 %v146
    %189 = vmatprep.subr.mxu0 0.0
    %190 = vmatpush1.msra.mxu0 %v145
    %191 = vmatprep.subr.mxu0 0.0
    %192 = vmatpush1.msra.mxu0 %v144
    %193 = vmatprep.subr.mxu0 0.0
    %194 = vmatpush1.msra.mxu0 %v143
    %195 = vmatprep.subr.mxu0 0.0
    %196 = vmatpush1.msra.mxu0 %v142
    %197 = vmatprep.subr.mxu0 0.0
    %198 = vmatpush2.msra.mxu0 0.0
    %199 = vmatprep.subr.mxu0 0.0
    %200 = vmatpush2.msra.mxu0 0.0
    %201 = vmatprep.subr.mxu0 0.0
    %202 = vmatpush2.msra.mxu0 0.0
    %203 = vmatprep.subr.mxu0 0.0
    %204 = vmatpush2.msra.mxu0 0.0
    %205 = vmatprep.subr.mxu0 0.0
    %206 = vmatpush2.msra.mxu0 0.0
    %207 = vmatprep.subr.mxu0 0.0
    %208 = vmatpush2.msra.mxu0 0.0
    %209 = vmatprep.subr.mxu0 0.0
    %210 = vmatpush2.msra.mxu0 0.0
    %211 = vmatprep.subr.mxu0 0.0
    %212 = vmatpush2.msra.mxu0 0.0
    %213 = vmatprep.subr.mxu0 0.0
    %214 = vmatpush2.msra.mxu0 0.0
    %215 = vmatprep.subr.mxu0 0.0
    %216 = vmatpush2.msra.mxu0 0.0
    %217 = vmatprep.subr.mxu0 0.0
    %218 = vmatpush2.msra.mxu0 0.0
    %219 = vmatprep.subr.mxu0 0.0
    %220 = vmatpush2.msra.mxu0 0.0
    %221 = vmatprep.subr.mxu0 0.0
    %222 = vmatpush2.msra.mxu0 0.0
    %223 = vmatprep.subr.mxu0 0.0
    %224 = vmatpush2.msra.mxu0 0.0
    %225 = vmatprep.subr.mxu0 0.0
    %226 = vmatpush2.msra.mxu0 0.0
    %227 = vmatprep.subr.mxu0 0.0
    %228 = vmatpush2.msra.mxu0 0.0
    %229 = vmatprep.mubr.f32.mxu0 0.0
    %230 = vmatmul.mubr.f32.gmra.mxu0 %v141
    %v231 = vpop.f32.mrf.mxu0
    %v232 = vadd.f32 %v163, %v231
    %v233 = vpop.f32.mrf.mxu0
    %234 = vdwg.mxu0
    %v235 = vxor.u32 %v232, 2147483648
    %v236 = vmul.f32 %v235, 1.442695
    %v237 = vpow.pop %v236
    %v238 = vadd.f32 %v237, 1.0
    %v239 = vrcp.pop %v238
    %v240 = vmul.f32 1.0, %v239
    %241 = vst [vmem:[#allocation8] sm:$0xff] %v240
    // Predicated region
    $region34: #{decoder_forward_padded.1} parent=1 // pred_check
      _
    $region35: #{decoder_forward_padded.1} parent=1 // pred_check_branch
      %243 = sbr.rel (0) target = $region37
    $region36: #{decoder_forward_padded.1} parent=1 // pred_region
      %s245 = ssub.s32 128, 128
      %246 = vsyncadd [#allocation4], %s245
      %s248 = sshll.u32 [#allocation8], 4
      %s249 = int_to_ptr.vmem [resolvable:$true] %s248
      %251 = dma.vmem_to_hbm [thread:$0]  %s249, 128, %s5, [#allocation4]
    $region37: #{decoder_forward_padded.1} parent=1 // pred_fallthru
      _
    // Predicated region
    $region38: #{decoder_forward_padded.1} parent=1 // pred_check
      _
    $region39: #{decoder_forward_padded.1} parent=1 // pred_check_branch
      %253 = sbr.rel (0) target = $region41
    $region40: #{decoder_forward_padded.1} parent=1 // pred_region
      %254 = dma.done [#allocation4], 128
    $region41: #{decoder_forward_padded.1} parent=1 // pred_fallthru
      _
    %255 = vsyncpa [#allocation3], 1
    %256 = vsyncpa [#allocation6], 1
    %257 = vsyncpa [#allocation4], 1

</llo_original>
